<compile_context>
chip_gen: v5e
topology: v5e:2x2
jax: 0.10.0
libtpu: 0.0.40
codegen_flags: <defaults>
</compile_context>

<pallas_src>
import jax
import jax.numpy as jnp
from jax.experimental import pallas as pl
from jax.experimental.pallas import tpu as pltpu


def _identity_kernel(x_ref, o_ref):
    # Pass-through: copy the resident VMEM block of the input to the output
    # view (which aliases the same HBM buffer).
    o_ref[...] = x_ref[...]


def identity_head(x: jax.Array) -> jax.Array:
    """IdentityHead.forward(x) -> x via a single aliased Pallas copy kernel."""
    orig_shape = x.shape

    # Flatten to 2D (rows, cols): identity is layout agnostic.
    if x.ndim == 0:
        x2 = x.reshape(1, 1)
    elif x.ndim == 1:
        x2 = x.reshape(1, -1)
    else:
        x2 = x.reshape(-1, x.shape[-1])
    R, C = x2.shape

    itemsize = jnp.dtype(x.dtype).itemsize
    # dtype-aware minimum sublane tile: 8 (4-byte), 16 (2-byte), 32 (1-byte).
    sublane = {4: 8, 2: 16, 1: 32}.get(itemsize, 8)

    # Row tile: large, lane-dense blocks spanning the full column extent.
    # ~4 MiB per block keeps double-buffered in+out (<= 4 x block bytes) well
    # inside every generation's scoped VMEM (v5e 16 MiB ... v7x 64 MiB).
    block_budget_bytes = 4 * 1024 * 1024
    rows_fitting = (block_budget_bytes // max(1, C * itemsize)) // sublane * sublane
    rows_fitting = max(sublane, rows_fitting)

    if R <= rows_fitting:
        # Whole array in one block: full-extent dims always satisfy the
        # (sublane, 128) constraint, so no padding / slicing is ever needed.
        tile_rows = R
        grid = (1,)
    else:
        tile_rows = rows_fitting
        grid = (pl.cdiv(R, tile_rows),)

    out = pl.pallas_call(
        _identity_kernel,
        out_shape=jax.ShapeDtypeStruct((R, C), x.dtype),
        grid_spec=pltpu.PrefetchScalarGridSpec(
            num_scalar_prefetch=0,
            grid=grid,
            in_specs=[pl.BlockSpec((tile_rows, C), lambda i: (i, 0))],
            out_specs=pl.BlockSpec((tile_rows, C), lambda i: (i, 0)),
        ),
        # Output aliases the input HBM buffer: no extra output allocation, and
        # under a donating jit this becomes effectively in-place.
        input_output_aliases={0: 0},
        compiler_params=pltpu.CompilerParams(
            # 1-D row grid; on v7x (2 TCs/chip) row blocks shard across cores.
            dimension_semantics=("parallel",),
            vmem_limit_bytes=32 * 1024 * 1024,
        ),
    )(x2)

    return out.reshape(orig_shape)


if __name__ == "__main__":
    # IdentityHead has no parameters (its __init__ defines no weights).
    key = jax.random.PRNGKey(0)
    # Small embedding-like input a head layer receives: batch=2, hidden=32.
    x = jax.random.normal(key, (2, 32), dtype=jnp.float32)
    # Independent reference values from the same key (robust even if the input
    # buffer ends up donated/aliased by the kernel).
    expected = jax.random.normal(key, (2, 32), dtype=jnp.float32)

    y = identity_head(x)
    y = jax.block_until_ready(y)

    assert y.shape == expected.shape and y.dtype == expected.dtype
    assert bool(jnp.array_equal(y, expected))
    print("KERNEL_OK")
</pallas_src>

<mosaic_0001>
module attributes {stable_mosaic.version = 11 : i64} {
  func.func @_identity_kernel(%arg0: i32, %arg1: memref<2x32xf32, #tpu.memory_space<vmem>>, %arg2: memref<2x32xf32, #tpu.memory_space<vmem>>) attributes {dimension_semantics = [#tpu.dimension_semantics<parallel>], iteration_bounds = array<i64: 1>, scalar_prefetch = 0 : i64, scratch_operands = 0 : i64, tpu.core_type = #tpu.core_type<tc>, window_params = [{transform_indices = @transform_0, window_bounds = array<i64: 2, 32>}, {transform_indices = @transform_1, window_bounds = array<i64: 2, 32>}]} {
    %c0 = arith.constant 0 : index
    %c0_0 = arith.constant 0 : index
    %0 = vector.load %arg1[%c0, %c0_0] : memref<2x32xf32, #tpu.memory_space<vmem>>, vector<2x32xf32>
    %c0_1 = arith.constant 0 : index
    %c0_2 = arith.constant 0 : index
    %1 = vector.load %arg2[%c0_1, %c0_2] : memref<2x32xf32, #tpu.memory_space<vmem>>, vector<2x32xf32>
    tpu.vector_store %arg2[%c0_1, %c0_2], %0 {strides = array<i32>} : memref<2x32xf32, #tpu.memory_space<vmem>>, vector<2x32xf32>,
    return
  }
  func.func @transform_0(%arg0: i32) -> (i32, i32) {
    %c0_i32 = arith.constant 0 : i32
    %c0_i32_0 = arith.constant 0 : i32
    return %arg0, %c0_i32 : i32, i32
  }
  func.func @transform_1(%arg0: i32) -> (i32, i32) {
    %c0_i32 = arith.constant 0 : i32
    %c0_i32_0 = arith.constant 0 : i32
    return %arg0, %c0_i32 : i32, i32
  }
}

</mosaic_0001>

<llo_original>
// kernel: tpu_custom_call.1
$region0: #{tpu_custom_call.1}
  #allocation0 [shape = 'u32[]', space=smem, size = 0x4, offset = 0x4, fixed_abs, tag = 'smem constant byte address 0x4 - core index']
  #allocation1 [shape = 'u32[72,128]{1,0:T(1,128)}', space=vmem, size = 0x9000, scoped, tag = 'internal scratch']
  %s0 = inlined_call_operand.hbm [shape: f32[2,32], index: 0, kind: input, shape index: {}, may-alias: {0,1}]
  %s1 = inlined_call_operand.hbm [shape: f32[2,32], index: 1, kind: output, shape index: {}, may-alias: {0,1}]
  %s2 = sld [smem:[#allocation0]]
  $region18: #{tpu_custom_call.1} parent=0
    _
  %s4 = ssub.s32 1, %s2
  %s5 = scalar_select 0, %s4, %s2
  $region1: #{tpu_custom_call.1} parent=0
    #allocation2 [shape = 'u8[1024]{0}', space=vmem, size = 0x400, scoped, tag = 'input window, operand 0, single buffered']
    #allocation3 [shape = 's32[1]{0}', space=sflag, size = 0x4, scoped, tag = 'scoped memory for tpu_custom_call.1']
    #allocation4 [shape = 's32[1]{0}', space=sflag, size = 0x4, scoped, tag = 'scoped memory for tpu_custom_call.1']
    #allocation5 [shape = 'u8[1024]{0}', space=vmem, size = 0x400, scoped, tag = 'output window, operand 0, single buffered']
    %6 = vsyncpa [#allocation3], 0
    %7 = vsyncpa [#allocation4], 0
    // Predicated region
    $region2: #{tpu_custom_call.1} parent=1 // pred_check
      _
    $region3: #{tpu_custom_call.1} parent=1 // pred_check_branch
      %9 = sbr.rel (0) target = $region5
    $region4: #{tpu_custom_call.1} parent=1 // pred_region
      %11 = vsyncadd [#allocation3], 0
      %s13 = sshll.u32 %s0, 4
      %s14 = int_to_ptr.hbm [resolvable:$true] %s13
      %s15 = sshll.u32 [#allocation2], 4
      %s16 = int_to_ptr.vmem [resolvable:$true] %s15
      %18 = dma.hbm_to_vmem [thread:$0]  %s14, 32, %s16, [#allocation3]
    $region5: #{tpu_custom_call.1} parent=1 // pred_fallthru
      _
    // Predicated region
    $region6: #{tpu_custom_call.1} parent=1 // pred_check
      _
    $region7: #{tpu_custom_call.1} parent=1 // pred_check_branch
      %20 = sbr.rel (0) target = $region9
    $region8: #{tpu_custom_call.1} parent=1 // pred_region
      %22 = dma.done [#allocation3], 32
    $region9: #{tpu_custom_call.1} parent=1 // pred_fallthru
      _
    %v23 = vld [vmem:[#allocation2] sm:$0x3]
    %vm24 = vcmask 254976
    %25 = vst.msk [vmem:[#allocation5] sm:$0x3] %vm24, %v23
    // Predicated region
    $region10: #{tpu_custom_call.1} parent=1 // pred_check
      _
    $region11: #{tpu_custom_call.1} parent=1 // pred_check_branch
      %27 = sbr.rel (0) target = $region13
    $region12: #{tpu_custom_call.1} parent=1 // pred_region
      %29 = vsyncadd [#allocation4], 0
      %s31 = sshll.u32 [#allocation5], 4
      %s32 = int_to_ptr.vmem [resolvable:$true] %s31
      %s33 = sshll.u32 %s1, 4
      %s34 = int_to_ptr.hbm [resolvable:$true] %s33
      %36 = dma.vmem_to_hbm [thread:$0]  %s32, 32, %s34, [#allocation4]
    $region13: #{tpu_custom_call.1} parent=1 // pred_fallthru
      _
    // Predicated region
    $region14: #{tpu_custom_call.1} parent=1 // pred_check
      _
    $region15: #{tpu_custom_call.1} parent=1 // pred_check_branch
      %38 = sbr.rel (0) target = $region17
    $region16: #{tpu_custom_call.1} parent=1 // pred_region
      %40 = dma.done [#allocation4], 32
    $region17: #{tpu_custom_call.1} parent=1 // pred_fallthru
      _
    %41 = vsyncpa [#allocation3], 1
    %42 = vsyncpa [#allocation4], 1

</llo_original>
